<compile_context>
chip_gen: v7x
topology: tpu7x:2x2x1
jax: 0.10.0
libtpu: 0.0.40
codegen_flags: <defaults>
</compile_context>

<pallas_src>
import jax
import jax.numpy as jnp
from jax.experimental import pallas as pl
from jax.experimental.pallas import tpu as pltpu


# ------------------------------ fused kernel ---------------------------------

def build_cnn_stack(input_dim, init_channel, out_channels, ksizes, output_dim,
                    B, T):
    """Builds the fused forward fn. All config here is static Python."""
    channels = [init_channel] + list(out_channels)
    # get_padding(k, causal=False, future=False), stride 1 -> symmetric "same".
    pads = [((k - 1) // 2, k // 2) for k in ksizes]
    n_layers = len(ksizes)
    c_max = max(channels)
    t_pad_max = T + max(p_l + p_r for p_l, p_r in pads)
    dout_pad = 128 * pl.cdiv(output_dim, 128)      # lane-dense output width
    n_inputs = 4 + 3 * n_layers + 2
    BT = B * T

    def kernel(*refs):
        x_ref, m_ref, inw_ref, inb_ref = refs[:4]
        layer_refs = refs[4:4 + 3 * n_layers]
        outw_ref, outb_ref = refs[4 + 3 * n_layers:6 + 3 * n_layers]
        o_ref = refs[6 + 3 * n_layers]
        hbuf_ref = refs[7 + 3 * n_layers]          # VMEM scratch (B, t_pad, c_max)

        mf = m_ref[...]                            # (B*T, 1) float mask
        # input linear + apply_mask (batch folded into the MXU M dim)
        h = (jnp.dot(x_ref[...], inw_ref[...],
                     preferred_element_type=jnp.float32) + inb_ref[...]) * mf

        # Conv1d + folded BatchNorm affine + ReLU (stride 1), im2col single dot.
        for i in range(n_layers):
            w_ref, s_ref, sh_ref = layer_refs[3 * i:3 * i + 3]
            k = ksizes[i]
            pad_l, _ = pads[i]
            cin, cout = channels[i], channels[i + 1]
            # zero-pad the time axis inside VMEM (per batch element)
            hbuf_ref[...] = jnp.zeros_like(hbuf_ref)
            hbuf_ref[:, pad_l:pad_l + T, :cin] = h.reshape(B, T, cin)
            # im2col: lane-concat the K shifted time slices -> (B*T, K*Cin)
            cols = jnp.concatenate(
                [hbuf_ref[:, j:j + T, :cin] for j in range(k)], axis=-1)
            z = jnp.dot(cols.reshape(BT, k * cin), w_ref[...],
                        preferred_element_type=jnp.float32)
            h = jnp.maximum(z * s_ref[...] + sh_ref[...], 0.0)   # f32 epilogue

        # output linear (zero-padded to dout_pad lanes -> unmasked, dense store)
        y = (jnp.dot(h, outw_ref[...], preferred_element_type=jnp.float32)
             + outb_ref[...]) * mf
        o_ref[...] = y.astype(o_ref.dtype)

    fused_call = pl.pallas_call(
        kernel,
        out_shape=jax.ShapeDtypeStruct((BT, dout_pad), jnp.float32),
        in_specs=[pl.BlockSpec(memory_space=pltpu.MemorySpace.VMEM)] * n_inputs,
        out_specs=pl.BlockSpec(memory_space=pltpu.MemorySpace.VMEM),
        scratch_shapes=[pltpu.VMEM((B, t_pad_max, c_max), jnp.float32)],
    )

    @jax.jit
    def forward(x, mask, params):
        """x: (B, T, input_dim) f32, mask: (B, T) bool -> (B, T, output_dim)."""
        xf = x.reshape(BT, input_dim)
        mf = mask.astype(jnp.float32).reshape(BT, 1)
        inputs = [xf, mf, params["in_w"], params["in_b"]]
        for lyr in params["layers"]:
            inputs += [lyr["w"], lyr["scale"], lyr["shift"]]
        inputs += [params["out_w"], params["out_b"]]
        out = fused_call(*inputs)                            # (B*T, dout_pad)
        return out.reshape(B, T, dout_pad)[..., :output_dim]

    cfg = dict(channels=channels, pads=pads, ksizes=list(ksizes),
               dout_pad=dout_pad, output_dim=output_dim)
    return forward, cfg


# ------------------------------ parameters -----------------------------------

def init_cnn_stack_params(key, input_dim, init_channel, out_channels, ksizes,
                          output_dim, dout_pad, eps=1e-5):
    channels = [init_channel] + list(out_channels)
    keys = jax.random.split(key, 2 * len(out_channels) + 4)
    params = {}
    params["in_w"] = 0.1 * jax.random.normal(keys[0], (input_dim, init_channel),
                                             jnp.float32)
    params["in_b"] = 0.1 * jax.random.normal(keys[1], (1, init_channel),
                                             jnp.float32)
    layers = []
    for i, (cin, cout, k) in enumerate(zip(channels[:-1], channels[1:], ksizes)):
        w = 0.1 * jax.random.normal(keys[2 + 2 * i], (k, cin, cout), jnp.float32)
        conv_b = 0.1 * jax.random.normal(keys[3 + 2 * i], (1, cout), jnp.float32)
        # BatchNorm1d at fresh init, eval mode: gamma=1, beta=0, mean=0, var=1.
        bn_scale = jnp.ones((1, cout), jnp.float32) / jnp.sqrt(1.0 + eps)
        shift = conv_b * bn_scale            # (conv_b - mean)*scale + beta
        layers.append(dict(w=w.reshape(k * cin, cout),   # im2col weight layout
                           scale=bn_scale, shift=shift))
    params["layers"] = layers
    out_w = 0.1 * jax.random.normal(keys[-2], (channels[-1], output_dim),
                                    jnp.float32)
    out_b = 0.1 * jax.random.normal(keys[-1], (1, output_dim), jnp.float32)
    # zero-pad the output projection to the lane-dense width (sliced in wrapper)
    params["out_w"] = jnp.pad(out_w, ((0, 0), (0, dout_pad - output_dim)))
    params["out_b"] = jnp.pad(out_b, ((0, 0), (0, dout_pad - output_dim)))
    return params


# ------------------------------ reference ------------------------------------

def cnn_stack_reference(x, mask, params, channels, ksizes, pads, output_dim):
    """Pure-JAX (lax.conv) reference for correctness checking."""
    mf = mask.astype(jnp.float32)[..., None]
    h = (x @ params["in_w"] + params["in_b"][0]) * mf
    h = jnp.transpose(h, (0, 2, 1))                      # B C T
    for lyr, k, cin, cout, (pad_l, pad_r) in zip(
            params["layers"], ksizes, channels[:-1], channels[1:], pads):
        w_kio = lyr["w"].reshape(k, cin, cout)
        w_oik = jnp.transpose(w_kio, (2, 1, 0))          # (Cout, Cin, K)
        z = jax.lax.conv_general_dilated(
            h, w_oik, window_strides=(1,), padding=[(pad_l, pad_r)],
            dimension_numbers=("NCH", "OIH", "NCH"))
        z = z * lyr["scale"][0][None, :, None] + lyr["shift"][0][None, :, None]
        h = jnp.maximum(z, 0.0)
    h = jnp.transpose(h, (0, 2, 1))                      # B T C
    h = (h @ params["out_w"][:, :output_dim] + params["out_b"][0, :output_dim]) * mf
    return h


# --------------------------------- main ---------------------------------------

if __name__ == "__main__":
    B, T = 2, 16
    input_dim, init_channel = 12, 8
    out_channels = [16, 16]
    resample_ksize = [3, 5]           # resample_rates = [1, 1] (stride-1 path)
    output_dim = 10

    forward, cfg = build_cnn_stack(input_dim, init_channel, out_channels,
                                   resample_ksize, output_dim, B=B, T=T)

    key = jax.random.PRNGKey(0)
    kx, kp = jax.random.split(key)
    x = jax.random.normal(kx, (B, T, input_dim), jnp.float32)
    lengths = jnp.array([T, 11], jnp.int32)
    mask = jnp.arange(T)[None, :] < lengths[:, None]     # (B, T) bool

    params = init_cnn_stack_params(kp, input_dim, init_channel, out_channels,
                                   resample_ksize, output_dim, cfg["dout_pad"])

    out = jax.block_until_ready(forward(x, mask, params))

    with jax.default_matmul_precision("highest"):
        ref = cnn_stack_reference(x, mask, params, cfg["channels"],
                                  cfg["ksizes"], cfg["pads"], output_dim)

    assert out.shape == (B, T, output_dim), out.shape
    max_err = float(jnp.max(jnp.abs(out - ref)))
    assert jnp.allclose(out, ref, atol=5e-3, rtol=5e-3), max_err

    print("KERNEL_OK")
</pallas_src>

<mosaic_0001>
module attributes {stable_mosaic.version = 11 : i64} {
  func.func @kernel(%arg0: memref<32x12xf32, #tpu.memory_space<vmem>>, %arg1: memref<32x1xf32, #tpu.memory_space<vmem>>, %arg2: memref<12x8xf32, #tpu.memory_space<vmem>>, %arg3: memref<1x8xf32, #tpu.memory_space<vmem>>, %arg4: memref<24x16xf32, #tpu.memory_space<vmem>>, %arg5: memref<1x16xf32, #tpu.memory_space<vmem>>, %arg6: memref<1x16xf32, #tpu.memory_space<vmem>>, %arg7: memref<80x16xf32, #tpu.memory_space<vmem>>, %arg8: memref<1x16xf32, #tpu.memory_space<vmem>>, %arg9: memref<1x16xf32, #tpu.memory_space<vmem>>, %arg10: memref<16x128xf32, #tpu.memory_space<vmem>>, %arg11: memref<1x128xf32, #tpu.memory_space<vmem>>, %arg12: memref<32x128xf32, #tpu.memory_space<vmem>>, %arg13: memref<2x20x16xf32, #tpu.memory_space<vmem>>) attributes {dimension_semantics = [], scalar_prefetch = 0 : i64, scratch_operands = 1 : i64, tpu.core_type = #tpu.core_type<tc>} {
    %c0 = arith.constant 0 : index
    %c0_0 = arith.constant 0 : index
    %0 = vector.load %arg1[%c0, %c0_0] : memref<32x1xf32, #tpu.memory_space<vmem>>, vector<32x1xf32>
    %c0_1 = arith.constant 0 : index
    %c0_2 = arith.constant 0 : index
    %1 = vector.load %arg0[%c0_1, %c0_2] : memref<32x12xf32, #tpu.memory_space<vmem>>, vector<32x12xf32>
    %c0_3 = arith.constant 0 : index
    %c0_4 = arith.constant 0 : index
    %2 = vector.load %arg2[%c0_3, %c0_4] : memref<12x8xf32, #tpu.memory_space<vmem>>, vector<12x8xf32>
    %cst = arith.constant dense<0.000000e+00> : vector<32x8xf32>
    %3 = tpu.matmul %1, %2, %cst {dimension_numbers = #tpu.dot_dimension_numbers<[1], [0], [0], [1], [0, 0, 1, 1], [], []>} : vector<32x12xf32>, vector<12x8xf32>, vector<32x8xf32> -> vector<32x8xf32>
    %c0_5 = arith.constant 0 : index
    %c0_6 = arith.constant 0 : index
    %4 = vector.load %arg3[%c0_5, %c0_6] : memref<1x8xf32, #tpu.memory_space<vmem>>, vector<1x8xf32>
    %5 = vector.broadcast %4 : vector<1x8xf32> to vector<32x8xf32>
    %6 = arith.addf %3, %5 : vector<32x8xf32>
    %7 = vector.broadcast %0 : vector<32x1xf32> to vector<32x8xf32>
    %8 = arith.mulf %6, %7 : vector<32x8xf32>
    %cst_7 = arith.constant 0.000000e+00 : f32
    %9 = vector.broadcast %cst_7 : f32 to vector<2x20x16xf32>
    %c0_8 = arith.constant 0 : index
    %c0_9 = arith.constant 0 : index
    %c0_10 = arith.constant 0 : index
    %10 = vector.load %arg13[%c0_8, %c0_9, %c0_10] : memref<2x20x16xf32, #tpu.memory_space<vmem>>, vector<2x20x16xf32>
    tpu.vector_store %arg13[%c0_8, %c0_9, %c0_10], %9 {strides = array<i32>} : memref<2x20x16xf32, #tpu.memory_space<vmem>>, vector<2x20x16xf32>,
    %11 = vector.shape_cast %8 : vector<32x8xf32> to vector<2x16x8xf32>
    %c0_11 = arith.constant 0 : index
    %c1 = arith.constant 1 : index
    %c0_12 = arith.constant 0 : index
    %12 = vector.load %arg13[%c0_11, %c1, %c0_12] : memref<2x20x16xf32, #tpu.memory_space<vmem>>, vector<2x16x8xf32>
    tpu.vector_store %arg13[%c0_11, %c1, %c0_12], %11 {strides = array<i32>} : memref<2x20x16xf32, #tpu.memory_space<vmem>>, vector<2x16x8xf32>,
    %c0_13 = arith.constant 0 : index
    %c0_14 = arith.constant 0 : index
    %c0_15 = arith.constant 0 : index
    %13 = vector.load %arg13[%c0_13, %c0_14, %c0_15] : memref<2x20x16xf32, #tpu.memory_space<vmem>>, vector<2x16x8xf32>
    %c0_16 = arith.constant 0 : index
    %c1_17 = arith.constant 1 : index
    %c0_18 = arith.constant 0 : index
    %14 = vector.load %arg13[%c0_16, %c1_17, %c0_18] : memref<2x20x16xf32, #tpu.memory_space<vmem>>, vector<2x16x8xf32>
    %c0_19 = arith.constant 0 : index
    %c2 = arith.constant 2 : index
    %c0_20 = arith.constant 0 : index
    %15 = vector.load %arg13[%c0_19, %c2, %c0_20] : memref<2x20x16xf32, #tpu.memory_space<vmem>>, vector<2x16x8xf32>
    %16 = tpu.concatenate %13, %14, %15 in 2 : vector<2x16x8xf32>, vector<2x16x8xf32>, vector<2x16x8xf32> -> vector<2x16x24xf32>
    %17 = vector.shape_cast %16 : vector<2x16x24xf32> to vector<32x24xf32>
    %c0_21 = arith.constant 0 : index
    %c0_22 = arith.constant 0 : index
    %18 = vector.load %arg4[%c0_21, %c0_22] : memref<24x16xf32, #tpu.memory_space<vmem>>, vector<24x16xf32>
    %cst_23 = arith.constant dense<0.000000e+00> : vector<32x16xf32>
    %19 = tpu.matmul %17, %18, %cst_23 {dimension_numbers = #tpu.dot_dimension_numbers<[1], [0], [0], [1], [0, 0, 1, 1], [], []>} : vector<32x24xf32>, vector<24x16xf32>, vector<32x16xf32> -> vector<32x16xf32>
    %c0_24 = arith.constant 0 : index
    %c0_25 = arith.constant 0 : index
    %20 = vector.load %arg5[%c0_24, %c0_25] : memref<1x16xf32, #tpu.memory_space<vmem>>, vector<1x16xf32>
    %21 = vector.broadcast %20 : vector<1x16xf32> to vector<32x16xf32>
    %22 = arith.mulf %19, %21 : vector<32x16xf32>
    %c0_26 = arith.constant 0 : index
    %c0_27 = arith.constant 0 : index
    %23 = vector.load %arg6[%c0_26, %c0_27] : memref<1x16xf32, #tpu.memory_space<vmem>>, vector<1x16xf32>
    %24 = vector.broadcast %23 : vector<1x16xf32> to vector<32x16xf32>
    %25 = arith.addf %22, %24 : vector<32x16xf32>
    %cst_28 = arith.constant 0.000000e+00 : f32
    %26 = vector.broadcast %cst_28 : f32 to vector<32x16xf32>
    %27 = arith.maximumf %25, %26 : vector<32x16xf32>
    %cst_29 = arith.constant 0.000000e+00 : f32
    %28 = vector.broadcast %cst_29 : f32 to vector<2x20x16xf32>
    %c0_30 = arith.constant 0 : index
    %c0_31 = arith.constant 0 : index
    %c0_32 = arith.constant 0 : index
    %29 = vector.load %arg13[%c0_30, %c0_31, %c0_32] : memref<2x20x16xf32, #tpu.memory_space<vmem>>, vector<2x20x16xf32>
    tpu.vector_store %arg13[%c0_30, %c0_31, %c0_32], %28 {strides = array<i32>} : memref<2x20x16xf32, #tpu.memory_space<vmem>>, vector<2x20x16xf32>,
    %30 = vector.shape_cast %27 : vector<32x16xf32> to vector<2x16x16xf32>
    %c0_33 = arith.constant 0 : index
    %c2_34 = arith.constant 2 : index
    %c0_35 = arith.constant 0 : index
    %31 = vector.load %arg13[%c0_33, %c2_34, %c0_35] : memref<2x20x16xf32, #tpu.memory_space<vmem>>, vector<2x16x16xf32>
    tpu.vector_store %arg13[%c0_33, %c2_34, %c0_35], %30 {strides = array<i32>} : memref<2x20x16xf32, #tpu.memory_space<vmem>>, vector<2x16x16xf32>,
    %c0_36 = arith.constant 0 : index
    %c0_37 = arith.constant 0 : index
    %c0_38 = arith.constant 0 : index
    %32 = vector.load %arg13[%c0_36, %c0_37, %c0_38] : memref<2x20x16xf32, #tpu.memory_space<vmem>>, vector<2x16x16xf32>
    %c0_39 = arith.constant 0 : index
    %c1_40 = arith.constant 1 : index
    %c0_41 = arith.constant 0 : index
    %33 = vector.load %arg13[%c0_39, %c1_40, %c0_41] : memref<2x20x16xf32, #tpu.memory_space<vmem>>, vector<2x16x16xf32>
    %c0_42 = arith.constant 0 : index
    %c2_43 = arith.constant 2 : index
    %c0_44 = arith.constant 0 : index
    %34 = vector.load %arg13[%c0_42, %c2_43, %c0_44] : memref<2x20x16xf32, #tpu.memory_space<vmem>>, vector<2x16x16xf32>
    %c0_45 = arith.constant 0 : index
    %c3 = arith.constant 3 : index
    %c0_46 = arith.constant 0 : index
    %35 = vector.load %arg13[%c0_45, %c3, %c0_46] : memref<2x20x16xf32, #tpu.memory_space<vmem>>, vector<2x16x16xf32>
    %c0_47 = arith.constant 0 : index
    %c4 = arith.constant 4 : index
    %c0_48 = arith.constant 0 : index
    %36 = vector.load %arg13[%c0_47, %c4, %c0_48] : memref<2x20x16xf32, #tpu.memory_space<vmem>>, vector<2x16x16xf32>
    %37 = tpu.concatenate %32, %33, %34, %35, %36 in 2 : vector<2x16x16xf32>, vector<2x16x16xf32>, vector<2x16x16xf32>, vector<2x16x16xf32>, vector<2x16x16xf32> -> vector<2x16x80xf32>
    %38 = vector.shape_cast %37 : vector<2x16x80xf32> to vector<32x80xf32>
    %c0_49 = arith.constant 0 : index
    %c0_50 = arith.constant 0 : index
    %39 = vector.load %arg7[%c0_49, %c0_50] : memref<80x16xf32, #tpu.memory_space<vmem>>, vector<80x16xf32>
    %cst_51 = arith.constant dense<0.000000e+00> : vector<32x16xf32>
    %40 = tpu.matmul %38, %39, %cst_51 {dimension_numbers = #tpu.dot_dimension_numbers<[1], [0], [0], [1], [0, 0, 1, 1], [], []>} : vector<32x80xf32>, vector<80x16xf32>, vector<32x16xf32> -> vector<32x16xf32>
    %c0_52 = arith.constant 0 : index
    %c0_53 = arith.constant 0 : index
    %41 = vector.load %arg8[%c0_52, %c0_53] : memref<1x16xf32, #tpu.memory_space<vmem>>, vector<1x16xf32>
    %42 = vector.broadcast %41 : vector<1x16xf32> to vector<32x16xf32>
    %43 = arith.mulf %40, %42 : vector<32x16xf32>
    %c0_54 = arith.constant 0 : index
    %c0_55 = arith.constant 0 : index
    %44 = vector.load %arg9[%c0_54, %c0_55] : memref<1x16xf32, #tpu.memory_space<vmem>>, vector<1x16xf32>
    %45 = vector.broadcast %44 : vector<1x16xf32> to vector<32x16xf32>
    %46 = arith.addf %43, %45 : vector<32x16xf32>
    %cst_56 = arith.constant 0.000000e+00 : f32
    %47 = vector.broadcast %cst_56 : f32 to vector<32x16xf32>
    %48 = arith.maximumf %46, %47 : vector<32x16xf32>
    %c0_57 = arith.constant 0 : index
    %c0_58 = arith.constant 0 : index
    %49 = vector.load %arg10[%c0_57, %c0_58] : memref<16x128xf32, #tpu.memory_space<vmem>>, vector<16x128xf32>
    %cst_59 = arith.constant dense<0.000000e+00> : vector<32x128xf32>
    %50 = tpu.matmul %48, %49, %cst_59 {dimension_numbers = #tpu.dot_dimension_numbers<[1], [0], [0], [1], [0, 0, 1, 1], [], []>} : vector<32x16xf32>, vector<16x128xf32>, vector<32x128xf32> -> vector<32x128xf32>
    %c0_60 = arith.constant 0 : index
    %c0_61 = arith.constant 0 : index
    %51 = vector.load %arg11[%c0_60, %c0_61] : memref<1x128xf32, #tpu.memory_space<vmem>>, vector<1x128xf32>
    %52 = vector.broadcast %51 : vector<1x128xf32> to vector<32x128xf32>
    %53 = arith.addf %50, %52 : vector<32x128xf32>
    %54 = vector.broadcast %0 : vector<32x1xf32> to vector<32x128xf32>
    %55 = arith.mulf %53, %54 : vector<32x128xf32>
    %c0_62 = arith.constant 0 : index
    %c0_63 = arith.constant 0 : index
    %56 = vector.load %arg12[%c0_62, %c0_63] : memref<32x128xf32, #tpu.memory_space<vmem>>, vector<32x128xf32>
    tpu.vector_store %arg12[%c0_62, %c0_63], %55 {strides = array<i32>} : memref<32x128xf32, #tpu.memory_space<vmem>>, vector<32x128xf32>,
    return
  }
}

</mosaic_0001>

<llo_original>
// kernel: forward.1
$region0: #{forward.1}
  #allocation0 [shape = 'u32[]', space=smem, size = 0x4, offset = 0x4, fixed_abs, tag = 'smem constant byte address 0x4 - core index']
  #allocation1 [shape = 'u32[144,128]{1,0:T(1,128)}', space=vmem, size = 0x12000, scoped, tag = 'internal scratch']
  #allocation2 [shape = 'f32[2,20,16]{2,1,0:T(8,128)}', space=vmem, size = 0x6000, scoped, tag = 'scratch operand']
  %s0 = inlined_call_operand.vmem [shape: f32[32,12], index: 0, kind: input, shape index: {}]
  %s1 = inlined_call_operand.vmem [shape: f32[32,1], index: 1, kind: input, shape index: {}]
  %s2 = inlined_call_operand.vmem [shape: f32[12,8], index: 2, kind: input, shape index: {}]
  %s3 = inlined_call_operand.vmem [shape: f32[1,8], index: 3, kind: input, shape index: {}]
  %s4 = inlined_call_operand.vmem [shape: f32[24,16], index: 4, kind: input, shape index: {}]
  %s5 = inlined_call_operand.vmem [shape: f32[1,16], index: 5, kind: input, shape index: {}]
  %s6 = inlined_call_operand.vmem [shape: f32[1,16], index: 6, kind: input, shape index: {}]
  %s7 = inlined_call_operand.vmem [shape: f32[80,16], index: 7, kind: input, shape index: {}]
  %s8 = inlined_call_operand.vmem [shape: f32[1,16], index: 8, kind: input, shape index: {}]
  %s9 = inlined_call_operand.vmem [shape: f32[1,16], index: 9, kind: input, shape index: {}]
  %s10 = inlined_call_operand.vmem [shape: f32[16,128], index: 10, kind: input, shape index: {}]
  %s11 = inlined_call_operand.vmem [shape: f32[1,128], index: 11, kind: input, shape index: {}]
  %s12 = inlined_call_operand.vmem [shape: f32[32,128], index: 12, kind: output, shape index: {}]
  %s13 = sld [smem:[#allocation0]]
  $region58: #{forward.1} parent=0
    _
  %s15 = ssub.s32 1, %s13
  %s16 = scalar_select 0, %s15, %s13
  // Predicated region
  $region2: #{forward.1} parent=0 // pred_check
    _
  $region3: #{forward.1} parent=0 // pred_check_branch
    %18 = sbr.rel (0) target = $region5
  $region4: #{forward.1} parent=0 // pred_region
    _
  $region5: #{forward.1} parent=0 // pred_fallthru
    _
  // Predicated region
  $region6: #{forward.1} parent=0 // pred_check
    _
  $region7: #{forward.1} parent=0 // pred_check_branch
    %20 = sbr.rel (0) target = $region9
  $region8: #{forward.1} parent=0 // pred_region
    _
  $region9: #{forward.1} parent=0 // pred_fallthru
    _
  // Predicated region
  $region10: #{forward.1} parent=0 // pred_check
    _
  $region11: #{forward.1} parent=0 // pred_check_branch
    %22 = sbr.rel (0) target = $region13
  $region12: #{forward.1} parent=0 // pred_region
    _
  $region13: #{forward.1} parent=0 // pred_fallthru
    _
  // Predicated region
  $region14: #{forward.1} parent=0 // pred_check
    _
  $region15: #{forward.1} parent=0 // pred_check_branch
    %24 = sbr.rel (0) target = $region17
  $region16: #{forward.1} parent=0 // pred_region
    _
  $region17: #{forward.1} parent=0 // pred_fallthru
    _
  // Predicated region
  $region18: #{forward.1} parent=0 // pred_check
    _
  $region19: #{forward.1} parent=0 // pred_check_branch
    %26 = sbr.rel (0) target = $region21
  $region20: #{forward.1} parent=0 // pred_region
    _
  $region21: #{forward.1} parent=0 // pred_fallthru
    _
  // Predicated region
  $region22: #{forward.1} parent=0 // pred_check
    _
  $region23: #{forward.1} parent=0 // pred_check_branch
    %28 = sbr.rel (0) target = $region25
  $region24: #{forward.1} parent=0 // pred_region
    _
  $region25: #{forward.1} parent=0 // pred_fallthru
    _
  // Predicated region
  $region26: #{forward.1} parent=0 // pred_check
    _
  $region27: #{forward.1} parent=0 // pred_check_branch
    %30 = sbr.rel (0) target = $region29
  $region28: #{forward.1} parent=0 // pred_region
    _
  $region29: #{forward.1} parent=0 // pred_fallthru
    _
  // Predicated region
  $region30: #{forward.1} parent=0 // pred_check
    _
  $region31: #{forward.1} parent=0 // pred_check_branch
    %32 = sbr.rel (0) target = $region33
  $region32: #{forward.1} parent=0 // pred_region
    _
  $region33: #{forward.1} parent=0 // pred_fallthru
    _
  // Predicated region
  $region34: #{forward.1} parent=0 // pred_check
    _
  $region35: #{forward.1} parent=0 // pred_check_branch
    %34 = sbr.rel (0) target = $region37
  $region36: #{forward.1} parent=0 // pred_region
    _
  $region37: #{forward.1} parent=0 // pred_fallthru
    _
  // Predicated region
  $region38: #{forward.1} parent=0 // pred_check
    _
  $region39: #{forward.1} parent=0 // pred_check_branch
    %36 = sbr.rel (0) target = $region41
  $region40: #{forward.1} parent=0 // pred_region
    _
  $region41: #{forward.1} parent=0 // pred_fallthru
    _
  // Predicated region
  $region42: #{forward.1} parent=0 // pred_check
    _
  $region43: #{forward.1} parent=0 // pred_check_branch
    %38 = sbr.rel (0) target = $region45
  $region44: #{forward.1} parent=0 // pred_region
    _
  $region45: #{forward.1} parent=0 // pred_fallthru
    _
  // Predicated region
  $region46: #{forward.1} parent=0 // pred_check
    _
  $region47: #{forward.1} parent=0 // pred_check_branch
    %40 = sbr.rel (0) target = $region49
  $region48: #{forward.1} parent=0 // pred_region
    _
  $region49: #{forward.1} parent=0 // pred_fallthru
    _
  %v41 = vld [vmem:[%s1] sm:$0xff]
  %v42 = vld [vmem:[%s1 + $0x8] sm:$0xff]
  %v43 = vld [vmem:[%s1 + $0x10] sm:$0xff]
  %v44 = vld [vmem:[%s1 + $0x18] sm:$0xff]
  %v45 = vld [vmem:[%s0] sm:$0xff]
  %v46 = vld [vmem:[%s0 + $0x8] sm:$0xff]
  %v47 = vld [vmem:[%s0 + $0x10] sm:$0xff]
  %v48 = vld [vmem:[%s0 + $0x18] sm:$0xff]
  %v49 = vld [vmem:[%s2] sm:$0xff]
  %v50 = vld [vmem:[%s2 + $0x8] sm:$0xf]
  %v51 = vld [vmem:[%s3] sm:$0x1]
  %v53 = vlaneseq
  %v54 = vshrl.u32 %v53, 7
  %v55 = vsub.s32 0, %v54
  %v56 = vrot.slane %v51, %v55
  %vm58 = vcmask 97280
  %v60 = vsel %vm58, %v45, 0
  %v63 = vsel %vm58, %v46, 0
  %v66 = vsel %vm58, %v47, 0
  %v69 = vsel %vm58, %v48, 0
  %vm71 = vcmask 1043456
  %v73 = vsel %vm71, %v50, 0
  %75 = vmatprep.subr.mxu0 0.0
  %76 = vmatpush1.msra.mxu0 %v49
  %77 = vmatprep.subr.mxu0 0.0
  %78 = vmatpush1.msra.mxu0 %v73
  %79 = vmatprep.subr.mxu0 0.0
  %80 = vmatpush1.msra.mxu0 0.0
  %81 = vmatprep.subr.mxu0 0.0
  %82 = vmatpush1.msra.mxu0 0.0
  %83 = vmatprep.subr.mxu0 0.0
  %84 = vmatpush1.msra.mxu0 0.0
  %85 = vmatprep.subr.mxu0 0.0
  %86 = vmatpush1.msra.mxu0 0.0
  %87 = vmatprep.subr.mxu0 0.0
  %88 = vmatpush1.msra.mxu0 0.0
  %89 = vmatprep.subr.mxu0 0.0
  %90 = vmatpush1.msra.mxu0 0.0
  %91 = vmatprep.subr.mxu0 0.0
  %92 = vmatpush1.msra.mxu0 0.0
  %93 = vmatprep.subr.mxu0 0.0
  %94 = vmatpush1.msra.mxu0 0.0
  %95 = vmatprep.subr.mxu0 0.0
  %96 = vmatpush1.msra.mxu0 0.0
  %97 = vmatprep.subr.mxu0 0.0
  %98 = vmatpush1.msra.mxu0 0.0
  %99 = vmatprep.subr.mxu0 0.0
  %100 = vmatpush1.msra.mxu0 0.0
  %101 = vmatprep.subr.mxu0 0.0
  %102 = vmatpush1.msra.mxu0 0.0
  %103 = vmatprep.subr.mxu0 0.0
  %104 = vmatpush1.msra.mxu0 0.0
  %105 = vmatprep.subr.mxu0 0.0
  %106 = vmatpush1.msra.mxu0 0.0
  %107 = vmatprep.subr.mxu0 0.0
  %108 = vmatpush1.msra.mxu0 0.0
  %109 = vmatprep.subr.mxu0 0.0
  %110 = vmatpush1.msra.mxu0 0.0
  %111 = vmatprep.subr.mxu0 0.0
  %112 = vmatpush1.msra.mxu0 0.0
  %113 = vmatprep.subr.mxu0 0.0
  %114 = vmatpush1.msra.mxu0 0.0
  %115 = vmatprep.subr.mxu0 0.0
  %116 = vmatpush1.msra.mxu0 0.0
  %117 = vmatprep.subr.mxu0 0.0
  %118 = vmatpush1.msra.mxu0 0.0
  %119 = vmatprep.subr.mxu0 0.0
  %120 = vmatpush1.msra.mxu0 0.0
  %121 = vmatprep.subr.mxu0 0.0
  %122 = vmatpush1.msra.mxu0 0.0
  %123 = vmatprep.subr.mxu0 0.0
  %124 = vmatpush1.msra.mxu0 0.0
  %125 = vmatprep.subr.mxu0 0.0
  %126 = vmatpush1.msra.mxu0 0.0
  %127 = vmatprep.subr.mxu0 0.0
  %128 = vmatpush1.msra.mxu0 0.0
  %129 = vmatprep.subr.mxu0 0.0
  %130 = vmatpush1.msra.mxu0 0.0
  %131 = vmatprep.subr.mxu0 0.0
  %132 = vmatpush1.msra.mxu0 0.0
  %133 = vmatprep.subr.mxu0 0.0
  %134 = vmatpush1.msra.mxu0 0.0
  %135 = vmatprep.subr.mxu0 0.0
  %136 = vmatpush1.msra.mxu0 0.0
  %137 = vmatprep.subr.mxu0 0.0
  %138 = vmatpush1.msra.mxu0 0.0
  %139 = vmatprep.mubr.f32.mxu0 0.0
  %140 = vmatmul.mubr.f32.gmra.mrb[0].mxu0 %v60
  %v141 = vpop.f32.mrb[0].mxu0
  %v142 = vadd.f32 %v56, %v141
  %v143 = vpop.f32.mrb[0].mxu0
  %144 = vmatprep.mubr.f32.mxu0 0.0
  %145 = vmatmul.mubr.f32.gmra.mrb[0].mxu0 %v63
  %v146 = vpop.f32.mrb[0].mxu0
  %v147 = vadd.f32 %v56, %v146
  %v148 = vpop.f32.mrb[0].mxu0
  %149 = vmatprep.mubr.f32.mxu0 0.0
  %150 = vmatmul.mubr.f32.gmra.mrb[0].mxu0 %v66
  %v151 = vpop.f32.mrb[0].mxu0
  %v152 = vadd.f32 %v56, %v151
  %v153 = vpop.f32.mrb[0].mxu0
  %154 = vmatprep.mubr.f32.mxu0 0.0
  %155 = vmatmul.mubr.f32.gmra.mrb[0].mxu0 %v69
  %v156 = vpop.f32.mrb[0].mxu0
  %v157 = vadd.f32 %v56, %v156
  %v158 = vpop.f32.mrb[0].mxu0
  %159 = vdwg.mxu0
  %161 = vset.pattern.permute.xlu0 0
  %162 = vperm.xlu0 %161, %v41
  %v163 = vpop.permute.xlu0 %162
  %166 = vset.pattern.permute.xlu0 0
  %167 = vperm.xlu0 %166, %v42
  %v168 = vpop.permute.xlu0 %167
  %171 = vset.pattern.permute.xlu0 0
  %172 = vperm.xlu0 %171, %v43
  %v173 = vpop.permute.xlu0 %172
  %176 = vset.pattern.permute.xlu0 0
  %177 = vperm.xlu0 %176, %v44
  %v178 = vpop.permute.xlu0 %177
  %v180 = vmul.f32 %v142, %v163
  %v181 = vmul.f32 %v147, %v168
  %v182 = vmul.f32 %v152, %v173
  %v183 = vmul.f32 %v157, %v178
  %vm184 = vcmask 130048
  %185 = vst.msk [vmem:[#allocation2] sm:$0xff] %vm184, 0.0
  %186 = vst.msk [vmem:[#allocation2 + $0x8] sm:$0xff] %vm184, 0.0
  %vm187 = vcmask 125952
  %188 = vst.msk [vmem:[#allocation2 + $0x10] sm:$0xf] %vm187, 0.0
  %189 = vst.msk [vmem:[#allocation2 + $0x18] sm:$0xff] %vm184, 0.0
  %190 = vst.msk [vmem:[#allocation2 + $0x20] sm:$0xff] %vm184, 0.0
  %191 = vst.msk [vmem:[#allocation2 + $0x28] sm:$0xf] %vm187, 0.0
  %vm192 = vcmask 64512
  %193 = vst.msk [vmem:[#allocation2 + $0x1] sm:$0xff] %vm192, %v180
  %194 = vst.msk [vmem:[#allocation2 + $0x9] sm:$0xff] %vm192, %v181
  %195 = vst.msk [vmem:[#allocation2 + $0x19] sm:$0xff] %vm192, %v182
  %196 = vst.msk [vmem:[#allocation2 + $0x21] sm:$0xff] %vm192, %v183
  %v197 = vld [vmem:[#allocation2] sm:$0xff]
  %v198 = vld [vmem:[#allocation2 + $0x8] sm:$0xff]
  %v199 = vld [vmem:[#allocation2 + $0x18] sm:$0xff]
  %v200 = vld [vmem:[#allocation2 + $0x20] sm:$0xff]
  %v201 = vld [vmem:[#allocation2 + $0x1] sm:$0xff]
  %v202 = vld [vmem:[#allocation2 + $0x9] sm:$0xff]
  %v203 = vld [vmem:[#allocation2 + $0x19] sm:$0xff]
  %v204 = vld [vmem:[#allocation2 + $0x21] sm:$0xff]
  %v205 = vld [vmem:[#allocation2 + $0x2] sm:$0xff]
  %v206 = vld [vmem:[#allocation2 + $0xa] sm:$0xff]
  %v207 = vld [vmem:[#allocation2 + $0x1a] sm:$0xff]
  %v208 = vld [vmem:[#allocation2 + $0x22] sm:$0xff]
  %213 = vrot.lane.b32.xlu0 %v201, 8
  %v214 = vpop.permute.xlu0 %213
  %215 = vrot.lane.b32.xlu0 %v202, 8
  %v216 = vpop.permute.xlu0 %215
  %217 = vrot.lane.b32.xlu0 %v203, 8
  %v218 = vpop.permute.xlu0 %217
  %219 = vrot.lane.b32.xlu0 %v204, 8
  %v220 = vpop.permute.xlu0 %219
  %229 = vrot.lane.b32.xlu0 %v205, 16
  %v230 = vpop.permute.xlu0 %229
  %231 = vrot.lane.b32.xlu0 %v206, 16
  %v232 = vpop.permute.xlu0 %231
  %233 = vrot.lane.b32.xlu0 %v207, 16
  %v234 = vpop.permute.xlu0 %233
  %235 = vrot.lane.b32.xlu0 %v208, 16
  %v236 = vpop.permute.xlu0 %235
  %v241 = vsel %vm192, %v197, %v214
  %v242 = vsel %vm192, %v198, %v216
  %v243 = vsel %vm192, %v199, %v218
  %v244 = vsel %vm192, %v200, %v220
  %v245 = vsel %vm184, %v241, %v230
  %v246 = vsel %vm184, %v242, %v232
  %v247 = vsel %vm184, %v243, %v234
  %v248 = vsel %vm184, %v244, %v236
  %v249 = vld [vmem:[%s4] sm:$0xff]
  %v250 = vld [vmem:[%s4 + $0x8] sm:$0xff]
  %v251 = vld [vmem:[%s4 + $0x10] sm:$0xff]
  %vm252 = vcmask 195584
  %v254 = vsel %vm252, %v245, 0
  %v257 = vsel %vm252, %v246, 0
  %v260 = vsel %vm252, %v247, 0
  %v263 = vsel %vm252, %v248, 0
  %265 = vmatprep.subr.mxu0 0.0
  %266 = vmatpush1.msra.mxu0 %v249
  %267 = vmatprep.subr.mxu0 0.0
  %268 = vmatpush1.msra.mxu0 %v250
  %269 = vmatprep.subr.mxu0 0.0
  %270 = vmatpush1.msra.mxu0 %v251
  %271 = vmatprep.subr.mxu0 0.0
  %272 = vmatpush1.msra.mxu0 0.0
  %273 = vmatprep.subr.mxu0 0.0
  %274 = vmatpush1.msra.mxu0 0.0
  %275 = vmatprep.subr.mxu0 0.0
  %276 = vmatpush1.msra.mxu0 0.0
  %277 = vmatprep.subr.mxu0 0.0
  %278 = vmatpush1.msra.mxu0 0.0
  %279 = vmatprep.subr.mxu0 0.0
  %280 = vmatpush1.msra.mxu0 0.0
  %281 = vmatprep.subr.mxu0 0.0
  %282 = vmatpush1.msra.mxu0 0.0
  %283 = vmatprep.subr.mxu0 0.0
  %284 = vmatpush1.msra.mxu0 0.0
  %285 = vmatprep.subr.mxu0 0.0
  %286 = vmatpush1.msra.mxu0 0.0
  %287 = vmatprep.subr.mxu0 0.0
  %288 = vmatpush1.msra.mxu0 0.0
  %289 = vmatprep.subr.mxu0 0.0
  %290 = vmatpush1.msra.mxu0 0.0
  %291 = vmatprep.subr.mxu0 0.0
  %292 = vmatpush1.msra.mxu0 0.0
  %293 = vmatprep.subr.mxu0 0.0
  %294 = vmatpush1.msra.mxu0 0.0
  %295 = vmatprep.subr.mxu0 0.0
  %296 = vmatpush1.msra.mxu0 0.0
  %297 = vmatprep.subr.mxu0 0.0
  %298 = vmatpush1.msra.mxu0 0.0
  %299 = vmatprep.subr.mxu0 0.0
  %300 = vmatpush1.msra.mxu0 0.0
  %301 = vmatprep.subr.mxu0 0.0
  %302 = vmatpush1.msra.mxu0 0.0
  %303 = vmatprep.subr.mxu0 0.0
  %304 = vmatpush1.msra.mxu0 0.0
  %305 = vmatprep.subr.mxu0 0.0
  %306 = vmatpush1.msra.mxu0 0.0
  %307 = vmatprep.subr.mxu0 0.0
  %308 = vmatpush1.msra.mxu0 0.0
  %309 = vmatprep.subr.mxu0 0.0
  %310 = vmatpush1.msra.mxu0 0.0
  %311 = vmatprep.subr.mxu0 0.0
  %312 = vmatpush1.msra.mxu0 0.0
  %313 = vmatprep.subr.mxu0 0.0
  %314 = vmatpush1.msra.mxu0 0.0
  %315 = vmatprep.subr.mxu0 0.0
  %316 = vmatpush1.msra.mxu0 0.0
  %317 = vmatprep.subr.mxu0 0.0
  %318 = vmatpush1.msra.mxu0 0.0
  %319 = vmatprep.subr.mxu0 0.0
  %320 = vmatpush1.msra.mxu0 0.0
  %321 = vmatprep.subr.mxu0 0.0
  %322 = vmatpush1.msra.mxu0 0.0
  %323 = vmatprep.subr.mxu0 0.0
  %324 = vmatpush1.msra.mxu0 0.0
  %325 = vmatprep.subr.mxu0 0.0
  %326 = vmatpush1.msra.mxu0 0.0
  %327 = vmatprep.subr.mxu0 0.0
  %328 = vmatpush1.msra.mxu0 0.0
  %329 = vmatprep.mubr.f32.mxu0 0.0
  %330 = vmatmul.mubr.f32.gmra.mrb[0].mxu0 %v254
  %v331 = vpop.f32.mrb[0].mxu0
  %v332 = vadd.f32 0.0, %v331
  %v333 = vpop.f32.mrb[0].mxu0
  %334 = vmatprep.mubr.f32.mxu0 0.0
  %335 = vmatmul.mubr.f32.gmra.mrb[0].mxu0 %v257
  %v336 = vpop.f32.mrb[0].mxu0
  %v337 = vadd.f32 0.0, %v336
  %v338 = vpop.f32.mrb[0].mxu0
  %339 = vmatprep.mubr.f32.mxu0 0.0
  %340 = vmatmul.mubr.f32.gmra.mrb[0].mxu0 %v260
  %v341 = vpop.f32.mrb[0].mxu0
  %v342 = vadd.f32 0.0, %v341
  %v343 = vpop.f32.mrb[0].mxu0
  %344 = vmatprep.mubr.f32.mxu0 0.0
  %345 = vmatmul.mubr.f32.gmra.mrb[0].mxu0 %v263
  %v346 = vpop.f32.mrb[0].mxu0
  %v347 = vadd.f32 0.0, %v346
  %v348 = vpop.f32.mrb[0].mxu0
  %349 = vdwg.mxu0
  %v350 = vld [vmem:[%s5] sm:$0x1]
  %v352 = vlaneseq
  %v353 = vshrl.u32 %v352, 7
  %v354 = vsub.s32 0, %v353
  %v355 = vrot.slane %v350, %v354
  %v357 = vmul.f32 %v332, %v355
  %v358 = vmul.f32 %v337, %v355
  %v359 = vmul.f32 %v342, %v355
  %v360 = vmul.f32 %v347, %v355
  %v361 = vld [vmem:[%s6] sm:$0x1]
  %v363 = vlaneseq
  %v364 = vshrl.u32 %v363, 7
  %v365 = vsub.s32 0, %v364
  %v366 = vrot.slane %v361, %v365
  %v368 = vadd.f32 %v357, %v366
  %v369 = vadd.f32 %v358, %v366
  %v370 = vadd.f32 %v359, %v366
  %v371 = vadd.f32 %v360, %v366
  %v372 = vmax.f32 %v368, 0.0
  %v373 = vmax.f32 %v369, 0.0
  %v374 = vmax.f32 %v370, 0.0
  %v375 = vmax.f32 %v371, 0.0
  %376 = vst.msk [vmem:[#allocation2] sm:$0xff] %vm184, 0.0
  %377 = vst.msk [vmem:[#allocation2 + $0x8] sm:$0xff] %vm184, 0.0
  %378 = vst.msk [vmem:[#allocation2 + $0x10] sm:$0xf] %vm187, 0.0
  %379 = vst.msk [vmem:[#allocation2 + $0x18] sm:$0xff] %vm184, 0.0
  %380 = vst.msk [vmem:[#allocation2 + $0x20] sm:$0xff] %vm184, 0.0
  %381 = vst.msk [vmem:[#allocation2 + $0x28] sm:$0xf] %vm187, 0.0
  %382 = vst.msk [vmem:[#allocation2 + $0x2] sm:$0xff] %vm184, %v372
  %383 = vst.msk [vmem:[#allocation2 + $0xa] sm:$0xff] %vm184, %v373
  %384 = vst.msk [vmem:[#allocation2 + $0x1a] sm:$0xff] %vm184, %v374
  %385 = vst.msk [vmem:[#allocation2 + $0x22] sm:$0xff] %vm184, %v375
  %v386 = vld [vmem:[#allocation2] sm:$0xff]
  %v387 = vld [vmem:[#allocation2 + $0x8] sm:$0xff]
  %v388 = vld [vmem:[#allocation2 + $0x18] sm:$0xff]
  %v389 = vld [vmem:[#allocation2 + $0x20] sm:$0xff]
  %v390 = vld [vmem:[#allocation2 + $0x1] sm:$0xff]
  %v391 = vld [vmem:[#allocation2 + $0x9] sm:$0xff]
  %v392 = vld [vmem:[#allocation2 + $0x19] sm:$0xff]
  %v393 = vld [vmem:[#allocation2 + $0x21] sm:$0xff]
  %v394 = vld [vmem:[#allocation2 + $0x2] sm:$0xff]
  %v395 = vld [vmem:[#allocation2 + $0xa] sm:$0xff]
  %v396 = vld [vmem:[#allocation2 + $0x1a] sm:$0xff]
  %v397 = vld [vmem:[#allocation2 + $0x22] sm:$0xff]
  %v398 = vld [vmem:[#allocation2 + $0x3] sm:$0xff]
  %v399 = vld [vmem:[#allocation2 + $0xb] sm:$0xff]
  %v400 = vld [vmem:[#allocation2 + $0x1b] sm:$0xff]
  %v401 = vld [vmem:[#allocation2 + $0x23] sm:$0xff]
  %v402 = vld [vmem:[#allocation2 + $0x4] sm:$0xff]
  %v403 = vld [vmem:[#allocation2 + $0xc] sm:$0xff]
  %v404 = vld [vmem:[#allocation2 + $0x1c] sm:$0xff]
  %v405 = vld [vmem:[#allocation2 + $0x24] sm:$0xff]
  %410 = vrot.lane.b32.xlu0 %v390, 16
  %v411 = vpop.permute.xlu0 %410
  %412 = vrot.lane.b32.xlu0 %v391, 16
  %v413 = vpop.permute.xlu0 %412
  %414 = vrot.lane.b32.xlu0 %v392, 16
  %v415 = vpop.permute.xlu0 %414
  %416 = vrot.lane.b32.xlu0 %v393, 16
  %v417 = vpop.permute.xlu0 %416
  %426 = vrot.lane.b32.xlu0 %v394, 32
  %v427 = vpop.permute.xlu0 %426
  %428 = vrot.lane.b32.xlu0 %v395, 32
  %v429 = vpop.permute.xlu0 %428
  %430 = vrot.lane.b32.xlu0 %v396, 32
  %v431 = vpop.permute.xlu0 %430
  %432 = vrot.lane.b32.xlu0 %v397, 32
  %v433 = vpop.permute.xlu0 %432
  %442 = vrot.lane.b32.xlu0 %v398, 48
  %v443 = vpop.permute.xlu0 %442
  %444 = vrot.lane.b32.xlu0 %v399, 48
  %v445 = vpop.permute.xlu0 %444
  %446 = vrot.lane.b32.xlu0 %v400, 48
  %v447 = vpop.permute.xlu0 %446
  %448 = vrot.lane.b32.xlu0 %v401, 48
  %v449 = vpop.permute.xlu0 %448
  %458 = vrot.lane.b32.xlu0 %v402, 64
  %v459 = vpop.permute.xlu0 %458
  %460 = vrot.lane.b32.xlu0 %v403, 64
  %v461 = vpop.permute.xlu0 %460
  %462 = vrot.lane.b32.xlu0 %v404, 64
  %v463 = vpop.permute.xlu0 %462
  %464 = vrot.lane.b32.xlu0 %v405, 64
  %v465 = vpop.permute.xlu0 %464
  %v470 = vsel %vm184, %v386, %v411
  %v471 = vsel %vm184, %v387, %v413
  %v472 = vsel %vm184, %v388, %v415
  %v473 = vsel %vm184, %v389, %v417
  %vm474 = vcmask 261120
  %v475 = vsel %vm474, %v470, %v427
  %v476 = vsel %vm474, %v471, %v429
  %v477 = vsel %vm474, %v472, %v431
  %v478 = vsel %vm474, %v473, %v433
  %vm479 = vcmask 392192
  %v480 = vsel %vm479, %v475, %v443
  %v481 = vsel %vm479, %v476, %v445
  %v482 = vsel %vm479, %v477, %v447
  %v483 = vsel %vm479, %v478, %v449
  %vm484 = vcmask 523264
  %v485 = vsel %vm484, %v480, %v459
  %v486 = vsel %vm484, %v481, %v461
  %v487 = vsel %vm484, %v482, %v463
  %v488 = vsel %vm484, %v483, %v465
  %v489 = vld [vmem:[%s7] sm:$0xff]
  %v490 = vld [vmem:[%s7 + $0x8] sm:$0xff]
  %v491 = vld [vmem:[%s7 + $0x10] sm:$0xff]
  %v492 = vld [vmem:[%s7 + $0x18] sm:$0xff]
  %v493 = vld [vmem:[%s7 + $0x20] sm:$0xff]
  %v494 = vld [vmem:[%s7 + $0x28] sm:$0xff]
  %v495 = vld [vmem:[%s7 + $0x30] sm:$0xff]
  %v496 = vld [vmem:[%s7 + $0x38] sm:$0xff]
  %v497 = vld [vmem:[%s7 + $0x40] sm:$0xff]
  %v498 = vld [vmem:[%s7 + $0x48] sm:$0xff]
  %vm499 = vcmask 654336
  %v501 = vsel %vm499, %v485, 0
  %v504 = vsel %vm499, %v486, 0
  %v507 = vsel %vm499, %v487, 0
  %v510 = vsel %vm499, %v488, 0
  %512 = vmatprep.subr.mxu0 0.0
  %513 = vmatpush1.msra.mxu0 %v489
  %514 = vmatprep.subr.mxu0 0.0
  %515 = vmatpush1.msra.mxu0 %v490
  %516 = vmatprep.subr.mxu0 0.0
  %517 = vmatpush1.msra.mxu0 %v491
  %518 = vmatprep.subr.mxu0 0.0
  %519 = vmatpush1.msra.mxu0 %v492
  %520 = vmatprep.subr.mxu0 0.0
  %521 = vmatpush1.msra.mxu0 %v493
  %522 = vmatprep.subr.mxu0 0.0
  %523 = vmatpush1.msra.mxu0 %v494
  %524 = vmatprep.subr.mxu0 0.0
  %525 = vmatpush1.msra.mxu0 %v495
  %526 = vmatprep.subr.mxu0 0.0
  %527 = vmatpush1.msra.mxu0 %v496
  %528 = vmatprep.subr.mxu0 0.0
  %529 = vmatpush1.msra.mxu0 %v497
  %530 = vmatprep.subr.mxu0 0.0
  %531 = vmatpush1.msra.mxu0 %v498
  %532 = vmatprep.subr.mxu0 0.0
  %533 = vmatpush1.msra.mxu0 0.0
  %534 = vmatprep.subr.mxu0 0.0
  %535 = vmatpush1.msra.mxu0 0.0
  %536 = vmatprep.subr.mxu0 0.0
  %537 = vmatpush1.msra.mxu0 0.0
  %538 = vmatprep.subr.mxu0 0.0
  %539 = vmatpush1.msra.mxu0 0.0
  %540 = vmatprep.subr.mxu0 0.0
  %541 = vmatpush1.msra.mxu0 0.0
  %542 = vmatprep.subr.mxu0 0.0
  %543 = vmatpush1.msra.mxu0 0.0
  %544 = vmatprep.subr.mxu0 0.0
  %545 = vmatpush1.msra.mxu0 0.0
  %546 = vmatprep.subr.mxu0 0.0
  %547 = vmatpush1.msra.mxu0 0.0
  %548 = vmatprep.subr.mxu0 0.0
  %549 = vmatpush1.msra.mxu0 0.0
  %550 = vmatprep.subr.mxu0 0.0
  %551 = vmatpush1.msra.mxu0 0.0
  %552 = vmatprep.subr.mxu0 0.0
  %553 = vmatpush1.msra.mxu0 0.0
  %554 = vmatprep.subr.mxu0 0.0
  %555 = vmatpush1.msra.mxu0 0.0
  %556 = vmatprep.subr.mxu0 0.0
  %557 = vmatpush1.msra.mxu0 0.0
  %558 = vmatprep.subr.mxu0 0.0
  %559 = vmatpush1.msra.mxu0 0.0
  %560 = vmatprep.subr.mxu0 0.0
  %561 = vmatpush1.msra.mxu0 0.0
  %562 = vmatprep.subr.mxu0 0.0
  %563 = vmatpush1.msra.mxu0 0.0
  %564 = vmatprep.subr.mxu0 0.0
  %565 = vmatpush1.msra.mxu0 0.0
  %566 = vmatprep.subr.mxu0 0.0
  %567 = vmatpush1.msra.mxu0 0.0
  %568 = vmatprep.subr.mxu0 0.0
  %569 = vmatpush1.msra.mxu0 0.0
  %570 = vmatprep.subr.mxu0 0.0
  %571 = vmatpush1.msra.mxu0 0.0
  %572 = vmatprep.subr.mxu0 0.0
  %573 = vmatpush1.msra.mxu0 0.0
  %574 = vmatprep.subr.mxu0 0.0
  %575 = vmatpush1.msra.mxu0 0.0
  %576 = vmatprep.mubr.f32.mxu0 0.0
  %577 = vmatmul.mubr.f32.gmra.mrb[0].mxu0 %v501
  %v578 = vpop.f32.mrb[0].mxu0
  %v579 = vadd.f32 0.0, %v578
  %v580 = vpop.f32.mrb[0].mxu0
  %581 = vmatprep.mubr.f32.mxu0 0.0
  %582 = vmatmul.mubr.f32.gmra.mrb[0].mxu0 %v504
  %v583 = vpop.f32.mrb[0].mxu0
  %v584 = vadd.f32 0.0, %v583
  %v585 = vpop.f32.mrb[0].mxu0
  %586 = vmatprep.mubr.f32.mxu0 0.0
  %587 = vmatmul.mubr.f32.gmra.mrb[0].mxu0 %v507
  %v588 = vpop.f32.mrb[0].mxu0
  %v589 = vadd.f32 0.0, %v588
  %v590 = vpop.f32.mrb[0].mxu0
  %591 = vmatprep.mubr.f32.mxu0 0.0
  %592 = vmatmul.mubr.f32.gmra.mrb[0].mxu0 %v510
  %v593 = vpop.f32.mrb[0].mxu0
  %v594 = vadd.f32 0.0, %v593
  %v595 = vpop.f32.mrb[0].mxu0
  %596 = vdwg.mxu0
  %v597 = vld [vmem:[%s8] sm:$0x1]
  %v599 = vlaneseq
  %v600 = vshrl.u32 %v599, 7
  %v601 = vsub.s32 0, %v600
  %v602 = vrot.slane %v597, %v601
  %v604 = vmul.f32 %v579, %v602
  %v605 = vmul.f32 %v584, %v602
  %v606 = vmul.f32 %v589, %v602
  %v607 = vmul.f32 %v594, %v602
  %v608 = vld [vmem:[%s9] sm:$0x1]
  %v610 = vlaneseq
  %v611 = vshrl.u32 %v610, 7
  %v612 = vsub.s32 0, %v611
  %v613 = vrot.slane %v608, %v612
  %v615 = vadd.f32 %v604, %v613
  %v616 = vadd.f32 %v605, %v613
  %v617 = vadd.f32 %v606, %v613
  %v618 = vadd.f32 %v607, %v613
  %v619 = vmax.f32 %v615, 0.0
  %v620 = vmax.f32 %v616, 0.0
  %v621 = vmax.f32 %v617, 0.0
  %v622 = vmax.f32 %v618, 0.0
  %v623 = vld [vmem:[%s10] sm:$0xff]
  %v624 = vld [vmem:[%s10 + $0x8] sm:$0xff]
  %v625 = vld [vmem:[%s11] sm:$0x1]
  %v627 = vlaneseq
  %v628 = vshrl.u32 %v627, 7
  %v629 = vsub.s32 0, %v628
  %v630 = vrot.slane %v625, %v629
  %v633 = vsel %vm184, %v619, 0
  %v636 = vsel %vm184, %v620, 0
  %v639 = vsel %vm184, %v621, 0
  %v642 = vsel %vm184, %v622, 0
  %644 = vmatprep.subr.mxu0 0.0
  %645 = vmatpush1.msra.mxu0 %v623
  %646 = vmatprep.subr.mxu0 0.0
  %647 = vmatpush1.msra.mxu0 %v624
  %648 = vmatprep.subr.mxu0 0.0
  %649 = vmatpush1.msra.mxu0 0.0
  %650 = vmatprep.subr.mxu0 0.0
  %651 = vmatpush1.msra.mxu0 0.0
  %652 = vmatprep.subr.mxu0 0.0
  %653 = vmatpush1.msra.mxu0 0.0
  %654 = vmatprep.subr.mxu0 0.0
  %655 = vmatpush1.msra.mxu0 0.0
  %656 = vmatprep.subr.mxu0 0.0
  %657 = vmatpush1.msra.mxu0 0.0
  %658 = vmatprep.subr.mxu0 0.0
  %659 = vmatpush1.msra.mxu0 0.0
  %660 = vmatprep.subr.mxu0 0.0
  %661 = vmatpush1.msra.mxu0 0.0
  %662 = vmatprep.subr.mxu0 0.0
  %663 = vmatpush1.msra.mxu0 0.0
  %664 = vmatprep.subr.mxu0 0.0
  %665 = vmatpush1.msra.mxu0 0.0
  %666 = vmatprep.subr.mxu0 0.0
  %667 = vmatpush1.msra.mxu0 0.0
  %668 = vmatprep.subr.mxu0 0.0
  %669 = vmatpush1.msra.mxu0 0.0
  %670 = vmatprep.subr.mxu0 0.0
  %671 = vmatpush1.msra.mxu0 0.0
  %672 = vmatprep.subr.mxu0 0.0
  %673 = vmatpush1.msra.mxu0 0.0
  %674 = vmatprep.subr.mxu0 0.0
  %675 = vmatpush1.msra.mxu0 0.0
  %676 = vmatprep.subr.mxu0 0.0
  %677 = vmatpush1.msra.mxu0 0.0
  %678 = vmatprep.subr.mxu0 0.0
  %679 = vmatpush1.msra.mxu0 0.0
  %680 = vmatprep.subr.mxu0 0.0
  %681 = vmatpush1.msra.mxu0 0.0
  %682 = vmatprep.subr.mxu0 0.0
  %683 = vmatpush1.msra.mxu0 0.0
  %684 = vmatprep.subr.mxu0 0.0
  %685 = vmatpush1.msra.mxu0 0.0
  %686 = vmatprep.subr.mxu0 0.0
  %687 = vmatpush1.msra.mxu0 0.0
  %688 = vmatprep.subr.mxu0 0.0
  %689 = vmatpush1.msra.mxu0 0.0
  %690 = vmatprep.subr.mxu0 0.0
  %691 = vmatpush1.msra.mxu0 0.0
  %692 = vmatprep.subr.mxu0 0.0
  %693 = vmatpush1.msra.mxu0 0.0
  %694 = vmatprep.subr.mxu0 0.0
  %695 = vmatpush1.msra.mxu0 0.0
  %696 = vmatprep.subr.mxu0 0.0
  %697 = vmatpush1.msra.mxu0 0.0
  %698 = vmatprep.subr.mxu0 0.0
  %699 = vmatpush1.msra.mxu0 0.0
  %700 = vmatprep.subr.mxu0 0.0
  %701 = vmatpush1.msra.mxu0 0.0
  %702 = vmatprep.subr.mxu0 0.0
  %703 = vmatpush1.msra.mxu0 0.0
  %704 = vmatprep.subr.mxu0 0.0
  %705 = vmatpush1.msra.mxu0 0.0
  %706 = vmatprep.subr.mxu0 0.0
  %707 = vmatpush1.msra.mxu0 0.0
  %708 = vmatprep.mubr.f32.mxu0 0.0
  %709 = vmatmul.mubr.f32.gmra.mrb[0].mxu0 %v633
  %v710 = vpop.f32.mrb[0].mxu0
  %v711 = vadd.f32 %v630, %v710
  %v712 = vpop.f32.mrb[0].mxu0
  %713 = vmatprep.mubr.f32.mxu0 0.0
  %714 = vmatmul.mubr.f32.gmra.mrb[0].mxu0 %v636
  %v715 = vpop.f32.mrb[0].mxu0
  %v716 = vadd.f32 %v630, %v715
  %v717 = vpop.f32.mrb[0].mxu0
  %718 = vmatprep.mubr.f32.mxu0 0.0
  %719 = vmatmul.mubr.f32.gmra.mrb[0].mxu0 %v639
  %v720 = vpop.f32.mrb[0].mxu0
  %v721 = vadd.f32 %v630, %v720
  %v722 = vpop.f32.mrb[0].mxu0
  %723 = vmatprep.mubr.f32.mxu0 0.0
  %724 = vmatmul.mubr.f32.gmra.mrb[0].mxu0 %v642
  %v725 = vpop.f32.mrb[0].mxu0
  %v726 = vadd.f32 %v630, %v725
  %v727 = vpop.f32.mrb[0].mxu0
  %728 = vdwg.mxu0
  %v729 = vmul.f32 %v711, %v163
  %v730 = vmul.f32 %v716, %v168
  %v731 = vmul.f32 %v721, %v173
  %v732 = vmul.f32 %v726, %v178
  %733 = vst [vmem:[%s12] sm:$0xff] %v729
  %734 = vst [vmem:[%s12 + $0x8] sm:$0xff] %v730
  %735 = vst [vmem:[%s12 + $0x10] sm:$0xff] %v731
  %736 = vst [vmem:[%s12 + $0x18] sm:$0xff] %v732
  // Predicated region
  $region50: #{forward.1} parent=0 // pred_check
    _
  $region51: #{forward.1} parent=0 // pred_check_branch
    %738 = sbr.rel (0) target = $region53
  $region52: #{forward.1} parent=0 // pred_region
    _
  $region53: #{forward.1} parent=0 // pred_fallthru
    _
  // Predicated region
  $region54: #{forward.1} parent=0 // pred_check
    _
  $region55: #{forward.1} parent=0 // pred_check_branch
    %740 = sbr.rel (0) target = $region57
  $region56: #{forward.1} parent=0 // pred_region
    _
  $region57: #{forward.1} parent=0 // pred_fallthru
    _

</llo_original>
